<compile_context>
chip_gen: v5e
topology: v5e:2x2
jax: 0.10.0
libtpu: 0.0.40
codegen_flags: <defaults>
</compile_context>

<pallas_src>
import math

import jax
import jax.numpy as jnp
from jax.experimental import pallas as pl
from jax.experimental.pallas import tpu as pltpu


def _round_up(x, m):
    return ((x + m - 1) // m) * m


# --------------------------------------------------------------------------- #
# Kernels
# --------------------------------------------------------------------------- #
def _mlp_resident_kernel(x_ref, w1_ref, b1_ref, w2_ref, b2_ref, o_ref):
    # [tb,S]@[S,Hp] -> +b1 -> ReLU -> [tb,Hp]@[Hp,A] -> +b2 (f32 accumulation).
    h = jnp.dot(x_ref[...], w1_ref[...], preferred_element_type=jnp.float32)
    h = jnp.maximum(h + b1_ref[...].astype(jnp.float32), 0.0)
    y = jnp.dot(h.astype(w2_ref.dtype), w2_ref[...],
                preferred_element_type=jnp.float32)
    o_ref[...] = (y + b2_ref[...].astype(jnp.float32)).astype(o_ref.dtype)


def _mlp_htiled_kernel(x_ref, w1_ref, b1_ref, w2_ref, b2_ref, o_ref, acc_ref):
    # Hidden-dim tiled variant: ReLU is elementwise per hidden unit, so
    # y = sum_k relu(x@W1[:,k] + b1[k]) @ W2[k,:] decomposes exactly.
    k = pl.program_id(1)

    @pl.when(k == 0)
    def _():
        acc_ref[...] = jnp.zeros_like(acc_ref)

    h = jnp.dot(x_ref[...], w1_ref[...], preferred_element_type=jnp.float32)
    h = jnp.maximum(h + b1_ref[...].astype(jnp.float32), 0.0)
    acc_ref[...] += jnp.dot(h.astype(w2_ref.dtype), w2_ref[...],
                            preferred_element_type=jnp.float32)

    @pl.when(k == pl.num_programs(1) - 1)
    def _():
        o_ref[...] = (acc_ref[...] + b2_ref[...].astype(jnp.float32)
                      ).astype(o_ref.dtype)


# --------------------------------------------------------------------------- #
# Planning helpers
# --------------------------------------------------------------------------- #
def _tpu_vmem_capacity_bytes():
    try:
        info = pltpu.get_tpu_info()
        cap = int(getattr(info, "vmem_capacity_bytes", 0) or 0)
        if cap > 0:
            return cap
    except Exception:
        pass
    return 64 * 1024 * 1024  # conservative default: v7x per-core physical VMEM


def _max_resident_tile(S, Hp, A, itemsize, budget, sub, max_rows=1024):
    """Largest sublane-aligned batch tile that fits with resident W1/W2.
    Returns < sub if even the smallest tile does not fit (switch strategies)."""
    w_bytes = 2 * (S * Hp + Hp + Hp * A + A) * itemsize   # assume double-buffered

    def step_bytes(t):
        # double-buffered x / out tiles + f32 hidden activation & output temp
        return 2 * t * (S + A) * itemsize + t * (Hp + A) * 4

    t = (max_rows // sub) * sub
    while t >= sub and w_bytes + step_bytes(t) > budget:
        t -= sub
    return t


def _plan_htiled(S, Hp, A, itemsize, budget, sub, max_rows=1024):
    """Pick (batch_tile_cap, tile_h) for the hidden-tiled path."""
    n = Hp // 128
    ths = [128 * d for d in range(n, 0, -1) if n % d == 0]  # divisors of Hp, desc
    for th in ths:
        w_bytes = 2 * (S * th + th + th * A + A) * itemsize  # streamed weights

        def step_bytes(t, th=th):
            return (2 * t * (S + A) * itemsize  # x / out tiles
                    + t * th * 4                # f32 hidden chunk
                    + t * A * 4)                # f32 accumulator scratch

        t = (max_rows // sub) * sub
        while t >= sub and w_bytes + step_bytes(t) > budget:
            t -= sub
        if t >= sub and (t >= 256 or th == 128):
            return t, th
    return 0, 128


def _pick_batch_tile(B, sub, max_tile, target_steps):
    """Pick (tile, Bpad). Prefer a tile that divides B exactly (no pad / no slice)."""
    max_tile = max(sub, (max_tile // sub) * sub)
    # Cap the tile so the grid has >= target_steps steps when B is big enough
    # (>= 2 per TensorCore on v7x so DMAs pipeline against compute per core).
    cap = max_tile
    if B >= target_steps * sub:
        cap = min(cap, max(sub, ((B // target_steps) // sub) * sub))
    cap = max(sub, cap)
    if B % sub == 0:
        best = 0
        t = cap
        while t >= sub:
            if B % t == 0:
                best = t
                break
            t -= sub
        # Accept the exact divisor unless it is pathologically small compared to
        # the tile that padding would allow.
        if best >= sub and (best * 4 >= cap or B <= max_tile):
            return best, B
    tile = min(cap, _round_up(B, sub))
    tile = max(sub, (tile // sub) * sub)
    return tile, _round_up(B, tile)


# --------------------------------------------------------------------------- #
# pallas_call builders
# --------------------------------------------------------------------------- #
def _build_resident_call(Bpad, S, Hp, A, tile_b, dtype, itemsize, vmem_limit):
    flops = 2 * Bpad * (S * Hp + Hp * A)
    bytes_accessed = itemsize * (Bpad * S + S * Hp + Hp + Hp * A + A + Bpad * A)
    return pl.pallas_call(
        _mlp_resident_kernel,
        out_shape=jax.ShapeDtypeStruct((Bpad, A), dtype),
        grid_spec=pltpu.PrefetchScalarGridSpec(
            num_scalar_prefetch=0,
            grid=(Bpad // tile_b,),
            in_specs=[
                pl.BlockSpec((tile_b, S), lambda i: (i, 0)),   # x tile
                pl.BlockSpec((S, Hp), lambda i: (0, 0)),       # W1 (resident)
                pl.BlockSpec((1, Hp), lambda i: (0, 0)),       # b1
                pl.BlockSpec((Hp, A), lambda i: (0, 0)),       # W2 (resident)
                pl.BlockSpec((1, A), lambda i: (0, 0)),        # b2
            ],
            out_specs=pl.BlockSpec((tile_b, A), lambda i: (i, 0)),
        ),
        compiler_params=pltpu.CompilerParams(
            dimension_semantics=("parallel",),
            vmem_limit_bytes=int(vmem_limit),
        ),
        cost_estimate=pl.CostEstimate(
            flops=flops, transcendentals=0, bytes_accessed=bytes_accessed),
    )


def _build_htiled_call(Bpad, S, Hp, A, tile_b, tile_h, dtype, itemsize, vmem_limit):
    flops = 2 * Bpad * (S * Hp + Hp * A)
    bytes_accessed = itemsize * (Bpad * S + S * Hp + Hp + Hp * A + A + Bpad * A)
    return pl.pallas_call(
        _mlp_htiled_kernel,
        out_shape=jax.ShapeDtypeStruct((Bpad, A), dtype),
        grid_spec=pltpu.PrefetchScalarGridSpec(
            num_scalar_prefetch=0,
            grid=(Bpad // tile_b, Hp // tile_h),
            in_specs=[
                pl.BlockSpec((tile_b, S), lambda i, k: (i, 0)),    # x tile
                pl.BlockSpec((S, tile_h), lambda i, k: (0, k)),    # W1 column block
                pl.BlockSpec((1, tile_h), lambda i, k: (0, k)),    # b1 block
                pl.BlockSpec((tile_h, A), lambda i, k: (k, 0)),    # W2 row block
                pl.BlockSpec((1, A), lambda i, k: (0, 0)),         # b2
            ],
            out_specs=pl.BlockSpec((tile_b, A), lambda i, k: (i, 0)),
            scratch_shapes=[pltpu.VMEM((tile_b, A), jnp.float32)],
        ),
        compiler_params=pltpu.CompilerParams(
            dimension_semantics=("parallel", "arbitrary"),
            vmem_limit_bytes=int(vmem_limit),
        ),
        cost_estimate=pl.CostEstimate(
            flops=flops, transcendentals=0, bytes_accessed=bytes_accessed),
    )


# --------------------------------------------------------------------------- #
# Public API
# --------------------------------------------------------------------------- #
def prepare_decoder_params(w1, b1, w2, b2):
    """Pad weights ONCE at init time (keeps the per-call forward pad-free).

    w1: [state_dim, hidden]   b1: [hidden]
    w2: [hidden, num_actions] b2: [num_actions]

    The hidden dim is zero-padded to a multiple of 128 lanes; relu(0)=0 and the
    padded W2 rows are zero, so results are exact. num_actions is left unpadded
    so output HBM traffic is B*A (not B*128).
    """
    S, H = w1.shape
    A = w2.shape[1]
    Hp = max(_round_up(H, 128), 128)
    return {
        "w1": jnp.pad(w1, ((0, 0), (0, Hp - H))),
        "b1": jnp.pad(b1, (0, Hp - H)).reshape(1, Hp),
        "w2": jnp.pad(w2, ((0, Hp - H), (0, 0))),
        "b2": jnp.reshape(b2, (1, A)),
    }


def action_decoder_forward(x, params, *, batch_tile=None, tile_h=None,
                           vmem_budget_bytes=None, force_path=None):
    """y = relu(x @ W1 + b1) @ W2 + b2 with params from prepare_decoder_params.

    Note: with bf16 inputs the hidden activation is rounded to bf16 before the
    second matmul (MXU accumulation stays f32).
    """
    w1p, b1p, w2p, b2p = params["w1"], params["b1"], params["w2"], params["b2"]
    B, S = x.shape
    Hp = w1p.shape[1]
    A = w2p.shape[1]
    out_dtype = x.dtype
    itemsize = jnp.dtype(x.dtype).itemsize
    sub = max(8, 32 // max(itemsize, 1))       # sublane group: 8 f32 / 16 bf16

    # Tiny batch: launch / per-step overhead dominates -> let XLA fuse it.
    if force_path is None and B < sub:
        h = jnp.maximum(jnp.dot(x, w1p) + b1p[0], 0.0)
        return (jnp.dot(h, w2p) + b2p[0]).astype(out_dtype)

    # Generation-aware VMEM sizing (v5e/v6e: 128 MiB, v7x: 64 MiB per core).
    cap = _tpu_vmem_capacity_bytes()
    if vmem_budget_bytes is None:
        vmem_budget_bytes = int(cap * 0.6)
    vmem_limit = int(min(cap, max(int(cap * 0.75), int(vmem_budget_bytes))))

    target_steps = 4   # >= 2 grid steps per TensorCore so DMAs pipeline (v7x)

    use_htiled = force_path == "htiled"
    resident_cap = 0
    if not use_htiled:
        resident_cap = _max_resident_tile(S, Hp, A, itemsize,
                                          vmem_budget_bytes, sub)
        if resident_cap < sub:
            if force_path == "resident":
                resident_cap = sub          # caller insists; may spill
            else:
                use_htiled = True           # weights too big to stay resident

    if use_htiled:
        cap_b, th = _plan_htiled(S, Hp, A, itemsize, vmem_budget_bytes, sub)
        if tile_h is not None:
            th = int(tile_h)
            if th % 128 != 0 or Hp % th != 0:
                raise ValueError(
                    "tile_h must be a multiple of 128 that divides the padded "
                    f"hidden dim ({Hp})")
        if cap_b < sub:
            if force_path == "htiled":
                cap_b = sub
            else:
                raise ValueError(
                    "ActionDecoder layer too large for the VMEM budget "
                    f"({vmem_budget_bytes} bytes); raise vmem_budget_bytes.")
    else:
        cap_b, th = resident_cap, None

    if batch_tile is not None:
        tile_b = max(sub, (int(batch_tile) // sub) * sub)
        Bpad = _round_up(B, tile_b)
    else:
        tile_b, Bpad = _pick_batch_tile(B, sub, cap_b, target_steps)

    xp = x if Bpad == B else jnp.pad(x, ((0, Bpad - B), (0, 0)))

    if use_htiled:
        call = _build_htiled_call(Bpad, S, Hp, A, tile_b, th, out_dtype,
                                  itemsize, vmem_limit)
    else:
        call = _build_resident_call(Bpad, S, Hp, A, tile_b, out_dtype,
                                    itemsize, vmem_limit)
    out = call(xp, w1p, b1p, w2p, b2p)
    return out if Bpad == B else out[:B]


def init_params(key, state_dim, hidden_dim, num_actions, dtype=jnp.float32):
    """nn.Linear-style init, stored [in, out] (transposed vs. PyTorch [out, in])."""
    k1, k2, k3, k4 = jax.random.split(key, 4)
    bound1 = 1.0 / math.sqrt(state_dim)
    bound2 = 1.0 / math.sqrt(hidden_dim)
    w1 = jax.random.uniform(k1, (state_dim, hidden_dim), dtype, -bound1, bound1)
    b1 = jax.random.uniform(k2, (hidden_dim,), dtype, -bound1, bound1)
    w2 = jax.random.uniform(k3, (hidden_dim, num_actions), dtype, -bound2, bound2)
    b2 = jax.random.uniform(k4, (num_actions,), dtype, -bound2, bound2)
    return w1, b1, w2, b2


if __name__ == "__main__":
    state_dim, hidden_dim, num_actions = 32, 64, 16

    key = jax.random.PRNGKey(0)
    kx, kp = jax.random.split(key)
    w1, b1, w2, b2 = init_params(kp, state_dim, hidden_dim, num_actions)
    params = prepare_decoder_params(w1, b1, w2, b2)

    def ref_fn(xx, w1=w1, b1=b1, w2=w2, b2=b2):
        return jnp.maximum(xx @ w1 + b1, 0.0) @ w2 + b2

    # 1) Resident-weight path with a multi-step grid (tile divides B, no pad/slice).
    x = jax.random.normal(kx, (64, state_dim), jnp.float32)
    out = action_decoder_forward(x, params)
    jax.block_until_ready(out)
    assert out.shape == (64, num_actions)
    assert jnp.allclose(out, ref_fn(x), atol=1e-5, rtol=1e-5)

    # 2) Ragged batch (pads internally, slices back).
    x2 = jax.random.normal(jax.random.PRNGKey(1), (13, state_dim), jnp.float32)
    out2 = action_decoder_forward(x2, params)
    jax.block_until_ready(out2)
    assert out2.shape == (13, num_actions)
    assert jnp.allclose(out2, ref_fn(x2), atol=1e-5, rtol=1e-5)

    # 3) Tiny batch takes the fused-XLA bypass.
    x3 = jax.random.normal(jax.random.PRNGKey(2), (4, state_dim), jnp.float32)
    out3 = action_decoder_forward(x3, params)
    jax.block_until_ready(out3)
    assert jnp.allclose(out3, ref_fn(x3), atol=1e-5, rtol=1e-5)

    # 4) Hidden-tiled fallback path (forced here; auto-used when weights exceed VMEM).
    w1b, b1b, w2b, b2b = init_params(jax.random.PRNGKey(3), state_dim, 256,
                                     num_actions)
    params_b = prepare_decoder_params(w1b, b1b, w2b, b2b)
    x4 = jax.random.normal(jax.random.PRNGKey(4), (32, state_dim), jnp.float32)
    out4 = action_decoder_forward(x4, params_b, force_path="htiled", tile_h=128)
    jax.block_until_ready(out4)
    ref4 = jnp.maximum(x4 @ w1b + b1b, 0.0) @ w2b + b2b
    assert out4.shape == (32, num_actions)
    assert jnp.allclose(out4, ref4, atol=1e-5, rtol=1e-5)

    print("KERNEL_OK")
</pallas_src>

<mosaic_0001>
module attributes {stable_mosaic.version = 11 : i64} {
  func.func @_mlp_resident_kernel(%arg0: i32, %arg1: memref<16x32xf32, #tpu.memory_space<vmem>>, %arg2: memref<32x128xf32, #tpu.memory_space<vmem>>, %arg3: memref<1x128xf32, #tpu.memory_space<vmem>>, %arg4: memref<128x16xf32, #tpu.memory_space<vmem>>, %arg5: memref<1x16xf32, #tpu.memory_space<vmem>>, %arg6: memref<16x16xf32, #tpu.memory_space<vmem>>) attributes {dimension_semantics = [#tpu.dimension_semantics<parallel>], iteration_bounds = array<i64: 4>, scalar_prefetch = 0 : i64, scratch_operands = 0 : i64, tpu.core_type = #tpu.core_type<tc>, window_params = [{transform_indices = @transform_0, window_bounds = array<i64: 16, 32>}, {pipeline_mode = #tpu.pipeline_mode<synchronous>, transform_indices = @transform_1, window_bounds = array<i64: 32, 128>}, {pipeline_mode = #tpu.pipeline_mode<synchronous>, transform_indices = @transform_2, window_bounds = array<i64: 1, 128>}, {pipeline_mode = #tpu.pipeline_mode<synchronous>, transform_indices = @transform_3, window_bounds = array<i64: 128, 16>}, {pipeline_mode = #tpu.pipeline_mode<synchronous>, transform_indices = @transform_4, window_bounds = array<i64: 1, 16>}, {transform_indices = @transform_5, window_bounds = array<i64: 16, 16>}]} {
    %c0 = arith.constant 0 : index
    %c0_0 = arith.constant 0 : index
    %0 = vector.load %arg1[%c0, %c0_0] : memref<16x32xf32, #tpu.memory_space<vmem>>, vector<16x32xf32>
    %c0_1 = arith.constant 0 : index
    %c0_2 = arith.constant 0 : index
    %1 = vector.load %arg2[%c0_1, %c0_2] : memref<32x128xf32, #tpu.memory_space<vmem>>, vector<32x128xf32>
    %cst = arith.constant dense<0.000000e+00> : vector<16x128xf32>
    %2 = tpu.matmul %0, %1, %cst {dimension_numbers = #tpu.dot_dimension_numbers<[1], [0], [0], [1], [0, 0, 1, 1], [], []>} : vector<16x32xf32>, vector<32x128xf32>, vector<16x128xf32> -> vector<16x128xf32>
    %c0_3 = arith.constant 0 : index
    %c0_4 = arith.constant 0 : index
    %3 = vector.load %arg3[%c0_3, %c0_4] : memref<1x128xf32, #tpu.memory_space<vmem>>, vector<1x128xf32>
    %4 = vector.broadcast %3 : vector<1x128xf32> to vector<16x128xf32>
    %5 = arith.addf %2, %4 : vector<16x128xf32>
    %cst_5 = arith.constant 0.000000e+00 : f32
    %6 = vector.broadcast %cst_5 : f32 to vector<16x128xf32>
    %7 = arith.maximumf %5, %6 : vector<16x128xf32>
    %c0_6 = arith.constant 0 : index
    %c0_7 = arith.constant 0 : index
    %8 = vector.load %arg4[%c0_6, %c0_7] : memref<128x16xf32, #tpu.memory_space<vmem>>, vector<128x16xf32>
    %cst_8 = arith.constant dense<0.000000e+00> : vector<16x16xf32>
    %9 = tpu.matmul %7, %8, %cst_8 {dimension_numbers = #tpu.dot_dimension_numbers<[1], [0], [0], [1], [0, 0, 1, 1], [], []>} : vector<16x128xf32>, vector<128x16xf32>, vector<16x16xf32> -> vector<16x16xf32>
    %c0_9 = arith.constant 0 : index
    %c0_10 = arith.constant 0 : index
    %10 = vector.load %arg5[%c0_9, %c0_10] : memref<1x16xf32, #tpu.memory_space<vmem>>, vector<1x16xf32>
    %11 = vector.broadcast %10 : vector<1x16xf32> to vector<16x16xf32>
    %12 = arith.addf %9, %11 : vector<16x16xf32>
    %c0_11 = arith.constant 0 : index
    %c0_12 = arith.constant 0 : index
    %13 = vector.load %arg6[%c0_11, %c0_12] : memref<16x16xf32, #tpu.memory_space<vmem>>, vector<16x16xf32>
    tpu.vector_store %arg6[%c0_11, %c0_12], %12 {strides = array<i32>} : memref<16x16xf32, #tpu.memory_space<vmem>>, vector<16x16xf32>,
    return
  }
  func.func @transform_0(%arg0: i32) -> (i32, i32) {
    %c0_i32 = arith.constant 0 : i32
    %c0_i32_0 = arith.constant 0 : i32
    return %arg0, %c0_i32 : i32, i32
  }
  func.func @transform_1(%arg0: i32) -> (i32, i32) {
    %c0_i32 = arith.constant 0 : i32
    %c0_i32_0 = arith.constant 0 : i32
    %c0_i32_1 = arith.constant 0 : i32
    return %c0_i32, %c0_i32_0 : i32, i32
  }
  func.func @transform_2(%arg0: i32) -> (i32, i32) {
    %c0_i32 = arith.constant 0 : i32
    %c0_i32_0 = arith.constant 0 : i32
    %c0_i32_1 = arith.constant 0 : i32
    return %c0_i32, %c0_i32_0 : i32, i32
  }
  func.func @transform_3(%arg0: i32) -> (i32, i32) {
    %c0_i32 = arith.constant 0 : i32
    %c0_i32_0 = arith.constant 0 : i32
    %c0_i32_1 = arith.constant 0 : i32
    return %c0_i32, %c0_i32_0 : i32, i32
  }
  func.func @transform_4(%arg0: i32) -> (i32, i32) {
    %c0_i32 = arith.constant 0 : i32
    %c0_i32_0 = arith.constant 0 : i32
    %c0_i32_1 = arith.constant 0 : i32
    return %c0_i32, %c0_i32_0 : i32, i32
  }
  func.func @transform_5(%arg0: i32) -> (i32, i32) {
    %c0_i32 = arith.constant 0 : i32
    %c0_i32_0 = arith.constant 0 : i32
    return %arg0, %c0_i32 : i32, i32
  }
}

</mosaic_0001>

<llo_original>
// kernel: tpu_custom_call.1
$region0: #{tpu_custom_call.1}
  #allocation0 [shape = 'u32[]', space=smem, size = 0x4, offset = 0x4, fixed_abs, tag = 'smem constant byte address 0x4 - core index']
  #allocation1 [shape = 'u32[72,128]{1,0:T(1,128)}', space=vmem, size = 0x9000, scoped, tag = 'internal scratch']
  %s0 = inlined_call_operand.vmem [shape: f32[64,32], index: 0, kind: input, shape index: {}]
  %s1 = inlined_call_operand.vmem [shape: f32[32,128], index: 1, kind: input, shape index: {}]
  %s2 = inlined_call_operand.vmem [shape: f32[1,128], index: 2, kind: input, shape index: {}]
  %s3 = inlined_call_operand.vmem [shape: f32[128,16], index: 3, kind: input, shape index: {}]
  %s4 = inlined_call_operand.vmem [shape: f32[1,16], index: 4, kind: input, shape index: {}]
  %s5 = inlined_call_operand.vmem [shape: f32[64,16], index: 5, kind: output, shape index: {}]
  %s6 = sld [smem:[#allocation0]]
  $region53: #{tpu_custom_call.1} parent=0
    _
  %s8 = ssub.s32 1, %s6
  %s9 = scalar_select 0, %s8, %s6
  loop: start=0, step=1, limit=6
  $region2: #{tpu_custom_call.1} parent=0 // loop_pre_header
    _
  $region3: #{tpu_custom_call.1} parent=0 // loop_header
    %s11 = sphi 0, %s15
    %p12 = scmp.ge.s32.totalorder %s11, 6
    %s21 = sphi 0, %s23
    %s24 = sphi 0, %s21
    %s25 = sphi 0, %s24
    %s41 = sphi 0, %s25
    %s45 = sphi 0, %s45
    %s47 = sphi 0, %s45
    %s48 = sphi 0, %s47
    %s62 = sphi 0, %s48
    %s66 = sphi 0, %s66
    %s68 = sphi 0, %s66
    %s69 = sphi 0, %s68
    %s83 = sphi 0, %s69
    %s87 = sphi 0, %s87
    %s89 = sphi 0, %s87
    %s90 = sphi 0, %s89
    %s104 = sphi 0, %s90
    %s108 = sphi 0, %s108
    %s110 = sphi 0, %s108
    %s111 = sphi 0, %s110
    %s125 = sphi 0, %s111
    %s131 = sphi 0, %s133
    %s134 = sphi 0, %s131
    %s135 = sphi 0, %s134
    %s151 = sphi 0, %s135
  $region4: #{tpu_custom_call.1} parent=0 // loop_header_branch
    %14 = sbr.rel (%p12) target = $region8
  $region5: #{tpu_custom_call.1} parent=0 // loop_body
    %s16 = ssub.s32 %s11, 1
    %s17 = ssub.s32 %s11, 2
    %s18 = sadd.s32 %s11, 1
    %s19 = ssub.s32 %s11, %s18
    %p20 = scmp.eq.s32.totalorder %s19, 0
    %s22 = sadd.s32 %s21, 1
    %s23 = scalar_select %p20, %s21, %s22
    %p26 = pneg %p20
    %p27 = scmp.eq.s32.totalorder %s11, 3
    %p28 = por %p26, %p27
    %p29 = scmp.ne.s32.totalorder %s21, %s24
    %p30 = scmp.eq.s32.totalorder %s11, 0
    %p31 = por %p29, %p30
    %p32 = scmp.ne.s32.totalorder %s21, %s24
    %p33 = scmp.eq.s32.totalorder %s16, 3
    %p34 = por %p32, %p33
    %p35 = scmp.ne.s32.totalorder %s24, %s25
    %p36 = scmp.eq.s32.totalorder %s16, 0
    %p37 = por %p35, %p36
    %p38 = scmp.ne.s32.totalorder %s24, %s25
    %p39 = scmp.eq.s32.totalorder %s17, 3
    %p40 = por %p38, %p39
    %p42 = scmp.ne.s32.totalorder %s25, %s41
    %p43 = scmp.eq.s32.totalorder %s17, 0
    %p44 = por %p42, %p43
    %s46 = sadd.s32 %s45, 1
    %p49 = scmp.eq.s32.totalorder %s11, 3
    %p50 = scmp.ne.s32.totalorder %s45, %s47
    %p51 = scmp.eq.s32.totalorder %s11, 0
    %p52 = por %p50, %p51
    %p53 = scmp.ne.s32.totalorder %s45, %s47
    %p54 = scmp.eq.s32.totalorder %s16, 3
    %p55 = por %p53, %p54
    %p56 = scmp.ne.s32.totalorder %s47, %s48
    %p57 = scmp.eq.s32.totalorder %s16, 0
    %p58 = por %p56, %p57
    %p59 = scmp.ne.s32.totalorder %s47, %s48
    %p60 = scmp.eq.s32.totalorder %s17, 3
    %p61 = por %p59, %p60
    %p63 = scmp.ne.s32.totalorder %s48, %s62
    %p64 = scmp.eq.s32.totalorder %s17, 0
    %p65 = por %p63, %p64
    %s67 = sadd.s32 %s66, 1
    %p70 = scmp.eq.s32.totalorder %s11, 3
    %p71 = scmp.ne.s32.totalorder %s66, %s68
    %p72 = scmp.eq.s32.totalorder %s11, 0
    %p73 = por %p71, %p72
    %p74 = scmp.ne.s32.totalorder %s66, %s68
    %p75 = scmp.eq.s32.totalorder %s16, 3
    %p76 = por %p74, %p75
    %p77 = scmp.ne.s32.totalorder %s68, %s69
    %p78 = scmp.eq.s32.totalorder %s16, 0
    %p79 = por %p77, %p78
    %p80 = scmp.ne.s32.totalorder %s68, %s69
    %p81 = scmp.eq.s32.totalorder %s17, 3
    %p82 = por %p80, %p81
    %p84 = scmp.ne.s32.totalorder %s69, %s83
    %p85 = scmp.eq.s32.totalorder %s17, 0
    %p86 = por %p84, %p85
    %s88 = sadd.s32 %s87, 1
    %p91 = scmp.eq.s32.totalorder %s11, 3
    %p92 = scmp.ne.s32.totalorder %s87, %s89
    %p93 = scmp.eq.s32.totalorder %s11, 0
    %p94 = por %p92, %p93
    %p95 = scmp.ne.s32.totalorder %s87, %s89
    %p96 = scmp.eq.s32.totalorder %s16, 3
    %p97 = por %p95, %p96
    %p98 = scmp.ne.s32.totalorder %s89, %s90
    %p99 = scmp.eq.s32.totalorder %s16, 0
    %p100 = por %p98, %p99
    %p101 = scmp.ne.s32.totalorder %s89, %s90
    %p102 = scmp.eq.s32.totalorder %s17, 3
    %p103 = por %p101, %p102
    %p105 = scmp.ne.s32.totalorder %s90, %s104
    %p106 = scmp.eq.s32.totalorder %s17, 0
    %p107 = por %p105, %p106
    %s109 = sadd.s32 %s108, 1
    %p112 = scmp.eq.s32.totalorder %s11, 3
    %p113 = scmp.ne.s32.totalorder %s108, %s110
    %p114 = scmp.eq.s32.totalorder %s11, 0
    %p115 = por %p113, %p114
    %p116 = scmp.ne.s32.totalorder %s108, %s110
    %p117 = scmp.eq.s32.totalorder %s16, 3
    %p118 = por %p116, %p117
    %p119 = scmp.ne.s32.totalorder %s110, %s111
    %p120 = scmp.eq.s32.totalorder %s16, 0
    %p121 = por %p119, %p120
    %p122 = scmp.ne.s32.totalorder %s110, %s111
    %p123 = scmp.eq.s32.totalorder %s17, 3
    %p124 = por %p122, %p123
    %p126 = scmp.ne.s32.totalorder %s111, %s125
    %p127 = scmp.eq.s32.totalorder %s17, 0
    %p128 = por %p126, %p127
    %s129 = ssub.s32 %s11, %s18
    %p130 = scmp.eq.s32.totalorder %s129, 0
    %s132 = sadd.s32 %s131, 1
    %s133 = scalar_select %p130, %s131, %s132
    %p136 = pneg %p130
    %p137 = scmp.eq.s32.totalorder %s11, 3
    %p138 = por %p136, %p137
    %p139 = scmp.ne.s32.totalorder %s131, %s134
    %p140 = scmp.eq.s32.totalorder %s11, 0
    %p141 = por %p139, %p140
    %p142 = scmp.ne.s32.totalorder %s131, %s134
    %p143 = scmp.eq.s32.totalorder %s16, 3
    %p144 = por %p142, %p143
    %p145 = scmp.ne.s32.totalorder %s134, %s135
    %p146 = scmp.eq.s32.totalorder %s16, 0
    %p147 = por %p145, %p146
    %p148 = scmp.ne.s32.totalorder %s134, %s135
    %p149 = scmp.eq.s32.totalorder %s17, 3
    %p150 = por %p148, %p149
    %p152 = scmp.ne.s32.totalorder %s135, %s151
    %p153 = scmp.eq.s32.totalorder %s17, 0
    %p154 = por %p152, %p153
    %p155 = scmp.le.s32.totalorder 1, %s11
    %p156 = scmp.lt.s32.totalorder %s11, 5
    %p157 = pnand %p155, %p156
    %p158 = pneg %p157
    // Predicated region
    $region9: #{tpu_custom_call.1} parent=5 // pred_check
      _
    $region10: #{tpu_custom_call.1} parent=5 // pred_check_branch
      %160 = sbr.rel (%p157) target = $region12
    $region11: #{tpu_custom_call.1} parent=5 // pred_region
      %s161 = ssub.s32 %s11, 1
      // Predicated region
      $region13: #{tpu_custom_call.1} parent=11 // pred_check
        %p162 = pneg %p58
      $region14: #{tpu_custom_call.1} parent=11 // pred_check_branch
        %164 = sbr.rel (%p162) target = $region16
      $region15: #{tpu_custom_call.1} parent=11 // pred_region
        _
      $region16: #{tpu_custom_call.1} parent=11 // pred_fallthru
        _
      // Predicated region
      $region17: #{tpu_custom_call.1} parent=11 // pred_check
        %p165 = pneg %p79
      $region18: #{tpu_custom_call.1} parent=11 // pred_check_branch
        %167 = sbr.rel (%p165) target = $region20
      $region19: #{tpu_custom_call.1} parent=11 // pred_region
        _
      $region20: #{tpu_custom_call.1} parent=11 // pred_fallthru
        _
      // Predicated region
      $region21: #{tpu_custom_call.1} parent=11 // pred_check
        %p168 = pneg %p100
      $region22: #{tpu_custom_call.1} parent=11 // pred_check_branch
        %170 = sbr.rel (%p168) target = $region24
      $region23: #{tpu_custom_call.1} parent=11 // pred_region
        _
      $region24: #{tpu_custom_call.1} parent=11 // pred_fallthru
        _
      // Predicated region
      $region25: #{tpu_custom_call.1} parent=11 // pred_check
        %p171 = pneg %p121
      $region26: #{tpu_custom_call.1} parent=11 // pred_check_branch
        %173 = sbr.rel (%p171) target = $region28
      $region27: #{tpu_custom_call.1} parent=11 // pred_region
        _
      $region28: #{tpu_custom_call.1} parent=11 // pred_fallthru
        _
    $region12: #{tpu_custom_call.1} parent=5 // pred_fallthru
      _
    %p174 = scmp.lt.s32.totalorder %s11, 4
    // Predicated region
    $region29: #{tpu_custom_call.1} parent=5 // pred_check
      %p175 = pneg %p174
    $region30: #{tpu_custom_call.1} parent=5 // pred_check_branch
      %177 = sbr.rel (%p175) target = $region32
    $region31: #{tpu_custom_call.1} parent=5 // pred_region
      // Predicated region
      $region33: #{tpu_custom_call.1} parent=31 // pred_check
        %p178 = pneg %p31
      $region34: #{tpu_custom_call.1} parent=31 // pred_check_branch
        %180 = sbr.rel (%p178) target = $region36
      $region35: #{tpu_custom_call.1} parent=31 // pred_region
        %s181 = smul.u32 2, %s11
        %p182 = scmp.lt.s32.totalorder %s181, 7
        %s183 = scalar_select %p182, %s181, 7
        %s184 = smul.addr %s183, 8
        %s185 = scalar_lea.vmem %s0, %s184
        %s186 = smul.u32 2, %s11
      $region36: #{tpu_custom_call.1} parent=31 // pred_fallthru
        _
    $region32: #{tpu_custom_call.1} parent=5 // pred_fallthru
      _
    %p187 = scmp.le.s32.totalorder 1, %s11
    %p188 = scmp.lt.s32.totalorder %s11, 5
    %p189 = pnand %p187, %p188
    %p190 = pneg %p189
    // Predicated region
    $region37: #{tpu_custom_call.1} parent=5 // pred_check
      _
    $region38: #{tpu_custom_call.1} parent=5 // pred_check_branch
      %192 = sbr.rel (%p189) target = $region40
    $region39: #{tpu_custom_call.1} parent=5 // pred_region
      %s193 = ssub.s32 %s11, 1
      %s194 = smul.u32 2, %s16
      %p195 = scmp.lt.s32.totalorder %s194, 7
      %s196 = scalar_select %p195, %s194, 7
      %s197 = smul.addr %s196, 8
      %s198 = scalar_lea.vmem %s0, %s197
      %p199 = pneg %p37
      %p200 = pneg %p34
      %p201 = pneg %p58
      %p202 = pneg %p55
      %p203 = pneg %p79
      %p204 = pneg %p76
      %p205 = pneg %p100
      %p206 = pneg %p97
      %p207 = pneg %p121
      %p208 = pneg %p118
      %p209 = pneg %p147
      %p210 = pneg %p144
      %s211 = smul.u32 2, %s16
      %p212 = scmp.lt.s32.totalorder %s211, 7
      %s213 = scalar_select %p212, %s211, 7
      %s214 = smul.addr %s213, 8
      %s215 = scalar_lea.vmem %s5, %s214
      %s216 = smul.u32 2, %s16
      %p217 = scmp.lt.s32.totalorder %s216, 7
      %s218 = scalar_select %p217, %s216, 7
      %s219 = smul.addr %s218, 8
      %s220 = scalar_lea.vmem %s0, %s219
      %s221 = smul.u32 2, %s16
      %s222 = smul.u32 2, %s16
      %p223 = scmp.lt.s32.totalorder %s222, 7
      %s224 = scalar_select %p223, %s222, 7
      %s225 = smul.addr %s224, 8
      %s226 = scalar_lea.vmem %s5, %s225
      %s227 = smul.u32 2, %s16
      %v228 = vld [vmem:[%s220] sm:$0xff]
      %v229 = vld [vmem:[%s220 + $0x8] sm:$0xff]
      %v230 = vld [vmem:[%s1] sm:$0xff]
      %v231 = vld [vmem:[%s1 + $0x8] sm:$0xff]
      %v232 = vld [vmem:[%s1 + $0x10] sm:$0xff]
      %v233 = vld [vmem:[%s1 + $0x18] sm:$0xff]
      %v234 = vld [vmem:[%s2] sm:$0x1]
      %v236 = vperm.slane %v234, 0
      %vm238 = vcmask 261120
      %v240 = vsel %vm238, %v228, 0
      %v243 = vsel %vm238, %v229, 0
      %245 = vmatpush.msra.mxu0 0.0
      %246 = vmatpush.msra.mxu0 0.0
      %247 = vmatpush.msra.mxu0 0.0
      %248 = vmatpush.msra.mxu0 0.0
      %249 = vmatpush.msra.mxu0 0.0
      %250 = vmatpush.msra.mxu0 0.0
      %251 = vmatpush.msra.mxu0 0.0
      %252 = vmatpush.msra.mxu0 0.0
      %253 = vmatpush.msra.mxu0 0.0
      %254 = vmatpush.msra.mxu0 0.0
      %255 = vmatpush.msra.mxu0 0.0
      %256 = vmatpush.msra.mxu0 0.0
      %257 = vmatpush.msra.mxu0 %v233
      %258 = vmatpush.msra.mxu0 %v232
      %259 = vmatpush.msra.mxu0 %v231
      %260 = vmatpush.msra.mxu0 %v230
      %261 = vmatmul.f32.gmra.mxu0 %v240
      %v262 = vpop.f32.mrf.mxu0
      %v263 = vadd.f32 %v236, %v262
      %264 = vmatmul.f32.gmra.mxu0 %v243
      %v265 = vpop.f32.mrf.mxu0
      %v266 = vadd.f32 %v236, %v265
      %267 = vdwg.mxu0
      %v268 = vmax.f32 %v263, 0.0
      %v269 = vmax.f32 %v266, 0.0
      %v270 = vld [vmem:[%s3] sm:$0xff]
      %v271 = vld [vmem:[%s3 + $0x8] sm:$0xff]
      %v272 = vld [vmem:[%s3 + $0x10] sm:$0xff]
      %v273 = vld [vmem:[%s3 + $0x18] sm:$0xff]
      %v274 = vld [vmem:[%s3 + $0x20] sm:$0xff]
      %v275 = vld [vmem:[%s3 + $0x28] sm:$0xff]
      %v276 = vld [vmem:[%s3 + $0x30] sm:$0xff]
      %v277 = vld [vmem:[%s3 + $0x38] sm:$0xff]
      %v278 = vld [vmem:[%s3 + $0x40] sm:$0xff]
      %v279 = vld [vmem:[%s3 + $0x48] sm:$0xff]
      %v280 = vld [vmem:[%s3 + $0x50] sm:$0xff]
      %v281 = vld [vmem:[%s3 + $0x58] sm:$0xff]
      %v282 = vld [vmem:[%s3 + $0x60] sm:$0xff]
      %v283 = vld [vmem:[%s3 + $0x68] sm:$0xff]
      %v284 = vld [vmem:[%s3 + $0x70] sm:$0xff]
      %v285 = vld [vmem:[%s3 + $0x78] sm:$0xff]
      %v286 = vld [vmem:[%s4] sm:$0x1]
      %v288 = vperm.slane %v286, 0
      %290 = vmatpush.msra.mxu0 %v285
      %291 = vmatpush.msra.mxu0 %v284
      %292 = vmatpush.msra.mxu0 %v283
      %293 = vmatpush.msra.mxu0 %v282
      %294 = vmatpush.msra.mxu0 %v281
      %295 = vmatpush.msra.mxu0 %v280
      %296 = vmatpush.msra.mxu0 %v279
      %297 = vmatpush.msra.mxu0 %v278
      %298 = vmatpush.msra.mxu0 %v277
      %299 = vmatpush.msra.mxu0 %v276
      %300 = vmatpush.msra.mxu0 %v275
      %301 = vmatpush.msra.mxu0 %v274
      %302 = vmatpush.msra.mxu0 %v273
      %303 = vmatpush.msra.mxu0 %v272
      %304 = vmatpush.msra.mxu0 %v271
      %305 = vmatpush.msra.mxu0 %v270
      %306 = vmatmul.f32.gmra.mxu0 %v268
      %v307 = vpop.f32.mrf.mxu0
      %v308 = vadd.f32 %v288, %v307
      %309 = vmatmul.f32.gmra.mxu0 %v269
      %v310 = vpop.f32.mrf.mxu0
      %v311 = vadd.f32 %v288, %v310
      %312 = vdwg.mxu0
      %vm313 = vcmask 130048
      %314 = vst.msk [vmem:[%s226] sm:$0xff] %vm313, %v308
      %315 = vst.msk [vmem:[%s226 + $0x8] sm:$0xff] %vm313, %v311
      %s316 = smul.u32 2, %s16
      %p317 = scmp.lt.s32.totalorder %s316, 7
      %s318 = scalar_select %p317, %s316, 7
      %s319 = smul.addr %s318, 8
      %s320 = scalar_lea.vmem %s5, %s319
      // Predicated region
      $region41: #{tpu_custom_call.1} parent=39 // pred_check
        %p321 = pneg %p144
      $region42: #{tpu_custom_call.1} parent=39 // pred_check_branch
        %323 = sbr.rel (%p321) target = $region44
      $region43: #{tpu_custom_call.1} parent=39 // pred_region
        %s324 = smul.u32 2, %s16
      $region44: #{tpu_custom_call.1} parent=39 // pred_fallthru
        _
    $region40: #{tpu_custom_call.1} parent=5 // pred_fallthru
      _
    %p325 = scmp.le.s32.totalorder 2, %s11
    // Predicated region
    $region45: #{tpu_custom_call.1} parent=5 // pred_check
      %p326 = pneg %p325
    $region46: #{tpu_custom_call.1} parent=5 // pred_check_branch
      %328 = sbr.rel (%p326) target = $region48
    $region47: #{tpu_custom_call.1} parent=5 // pred_region
      %s329 = ssub.s32 %s11, 2
      // Predicated region
      $region49: #{tpu_custom_call.1} parent=47 // pred_check
        %p330 = pneg %p150
      $region50: #{tpu_custom_call.1} parent=47 // pred_check_branch
        %332 = sbr.rel (%p330) target = $region52
      $region51: #{tpu_custom_call.1} parent=47 // pred_region
        %s333 = smul.u32 2, %s17
        %p334 = scmp.lt.s32.totalorder %s333, 7
        %s335 = scalar_select %p334, %s333, 7
        %s336 = smul.addr %s335, 8
        %s337 = scalar_lea.vmem %s5, %s336
      $region52: #{tpu_custom_call.1} parent=47 // pred_fallthru
        _
    $region48: #{tpu_custom_call.1} parent=5 // pred_fallthru
      _
  $region6: #{tpu_custom_call.1} parent=0 // loop_footer
    %s15 = sadd.s32 1, %s11
  $region7: #{tpu_custom_call.1} parent=0 // loop_footer_branch
    %10 = sbr.rel target = $region3
  $region8: #{tpu_custom_call.1} parent=0 // loop_exit
    _

</llo_original>
